<compile_context>
chip_gen: v5e
topology: v5e:2x2
jax: 0.10.0
libtpu: 0.0.40
codegen_flags: <defaults>
</compile_context>

<pallas_src>
import jax
import jax.numpy as jnp
from jax.experimental import pallas as pl
from jax.experimental.pallas import tpu as pltpu

_LANES = 128


def _identity_kernel(x_ref, o_ref):
    # Whole-array VMEM->VMEM copy: the entire CNN forward pass is `return X`.
    o_ref[...] = x_ref[...]


@jax.jit
def cnn_forward(x):
    """Pallas implementation of CNN.forward (identity). x: (N, C, H, W)."""
    orig_shape = x.shape
    total = x.size

    # Lane-dense 2-D view: last dim a multiple of 128 so every vector store is
    # an unmasked full-lane `vst`. The reshape is free wrapper-side layout
    # plumbing (no compute).
    if total % _LANES == 0:
        flat = x.reshape(total // _LANES, _LANES)
    else:
        flat = x.reshape(1, total)  # tiny/odd sizes: single full-array row

    # Gridless call: the whole (small) array is one VMEM-resident block —
    # one DMA in, one DMA out, a single copy bundle. For production-sized
    # activations this would instead tile flat slabs sized against the
    # per-generation VMEM budget (<=~8-12 MiB per buffer on v7x's 64 MiB).
    y = pl.pallas_call(
        _identity_kernel,
        out_shape=jax.ShapeDtypeStruct(flat.shape, flat.dtype),
        in_specs=[pl.BlockSpec(memory_space=pltpu.MemorySpace.VMEM)],
        out_specs=pl.BlockSpec(memory_space=pltpu.MemorySpace.VMEM),
        # Identity is pure data movement: alias input buffer to output so the
        # HBM write-back can be elided entirely when the input is donated.
        input_output_aliases={0: 0},
    )(flat)

    return y.reshape(orig_shape)


if __name__ == "__main__":
    key = jax.random.PRNGKey(0)
    x = jax.random.normal(key, (2, 4, 16, 16), dtype=jnp.float32)

    y = cnn_forward(x)
    jax.block_until_ready(y)

    assert y.shape == x.shape and y.dtype == x.dtype
    assert bool(jnp.array_equal(y, x))
    print("KERNEL_OK")
</pallas_src>

<mosaic_0001>
module attributes {stable_mosaic.version = 11 : i64} {
  func.func @_identity_kernel(%arg0: memref<16x128xf32, #tpu.memory_space<vmem>>, %arg1: memref<16x128xf32, #tpu.memory_space<vmem>>) attributes {dimension_semantics = [], scalar_prefetch = 0 : i64, scratch_operands = 0 : i64, tpu.core_type = #tpu.core_type<tc>} {
    %c0 = arith.constant 0 : index
    %c0_0 = arith.constant 0 : index
    %0 = vector.load %arg0[%c0, %c0_0] : memref<16x128xf32, #tpu.memory_space<vmem>>, vector<16x128xf32>
    %c0_1 = arith.constant 0 : index
    %c0_2 = arith.constant 0 : index
    %1 = vector.load %arg1[%c0_1, %c0_2] : memref<16x128xf32, #tpu.memory_space<vmem>>, vector<16x128xf32>
    tpu.vector_store %arg1[%c0_1, %c0_2], %0 {strides = array<i32>} : memref<16x128xf32, #tpu.memory_space<vmem>>, vector<16x128xf32>,
    return
  }
}

</mosaic_0001>

<llo_original>
// kernel: cnn_forward.1
$region0: #{cnn_forward.1}
  #allocation0 [shape = 'u32[]', space=smem, size = 0x4, offset = 0x4, fixed_abs, tag = 'smem constant byte address 0x4 - core index']
  #allocation1 [shape = 'u32[72,128]{1,0:T(1,128)}', space=vmem, size = 0x9000, scoped, tag = 'internal scratch']
  %s0 = inlined_call_operand.vmem [shape: f32[16,128], index: 0, kind: input, shape index: {}, may-alias: {0,1}]
  %s1 = inlined_call_operand.vmem [shape: f32[16,128], index: 1, kind: output, shape index: {}, may-alias: {0,1}]
  %s2 = sld [smem:[#allocation0]]
  $region14: #{cnn_forward.1} parent=0
    _
  %s4 = ssub.s32 1, %s2
  %s5 = scalar_select 0, %s4, %s2
  // Predicated region
  $region2: #{cnn_forward.1} parent=0 // pred_check
    _
  $region3: #{cnn_forward.1} parent=0 // pred_check_branch
    %7 = sbr.rel (0) target = $region5
  $region4: #{cnn_forward.1} parent=0 // pred_region
    _
  $region5: #{cnn_forward.1} parent=0 // pred_fallthru
    _
  %v8 = vld [vmem:[%s0] sm:$0xff]
  %v9 = vld [vmem:[%s0 + $0x8] sm:$0xff]
  %10 = vst [vmem:[%s1] sm:$0xff] %v8
  %11 = vst [vmem:[%s1 + $0x8] sm:$0xff] %v9
  // Predicated region
  $region6: #{cnn_forward.1} parent=0 // pred_check
    _
  $region7: #{cnn_forward.1} parent=0 // pred_check_branch
    %13 = sbr.rel (0) target = $region9
  $region8: #{cnn_forward.1} parent=0 // pred_region
    _
  $region9: #{cnn_forward.1} parent=0 // pred_fallthru
    _
  // Predicated region
  $region10: #{cnn_forward.1} parent=0 // pred_check
    _
  $region11: #{cnn_forward.1} parent=0 // pred_check_branch
    %15 = sbr.rel (0) target = $region13
  $region12: #{cnn_forward.1} parent=0 // pred_region
    _
  $region13: #{cnn_forward.1} parent=0 // pred_fallthru
    _

</llo_original>
